<compile_context>
chip_gen: v6e
topology: v6e:2x2x1
jax: 0.10.0
libtpu: 0.0.40
codegen_flags: <defaults>
</compile_context>

<pallas_src>
import functools

import numpy as np
import jax
import jax.numpy as jnp
from jax.experimental import pallas as pl
from jax.experimental.pallas import tpu as pltpu


def _round_up(x, m):
    return ((x + m - 1) // m) * m


def _vmem_budget_bytes():
    """~75% of per-core physical VMEM (~96 MiB on v5e/v6e, ~48 MiB on v7x)."""
    cap = 64 * 1024 * 1024
    try:
        info = pltpu.get_tpu_info()
        cap = int(getattr(info, "vmem_capacity_bytes", cap))
    except Exception:
        pass
    return cap * 3 // 4


def _pick_hidden_tile(hidden, th_max):
    """Largest th <= th_max with th % 128 == 0 and hidden % th == 0, else full hidden."""
    if hidden <= th_max or hidden % 128 != 0:
        return hidden
    for t in range(min(th_max, hidden), 0, -128):
        if t % 128 == 0 and hidden % t == 0:
            return t
    return hidden


def _pick_row_tile(M, tm_req):
    """Row tile <= tm_req, padded to multiples of 8; guarantee >=2 blocks on the
    parallel row axis (when M > 8) so both v7x TensorCores / megacore get work."""
    tm = min(tm_req, _round_up(M, 8))
    M_pad = _round_up(M, tm)
    if M_pad // tm < 2 and M > 8:
        tm = max(8, _round_up((M + 1) // 2, 8))
        M_pad = _round_up(M, tm)
    return tm, M_pad


# ----------------------------------------------------------------------------
# Kernels
# ----------------------------------------------------------------------------

def _ffn_resident_kernel(x_ref, w1_ref, b1_ref, w2_ref, b2_ref, o_ref):
    # Weights fully resident in VMEM (constant index_map -> DMA'd once per call).
    # x_ref: (tm, n_embd) in its original dtype; cast to bf16 in-kernel (VPU, hidden
    # under the MXU) so the wrapper never does a separate HBM cast pass.
    xb = x_ref[...].astype(w1_ref.dtype)
    h = jnp.dot(xb, w1_ref[...], preferred_element_type=jnp.float32)
    h = jnp.maximum(h + b1_ref[...], 0.0)                       # bias + ReLU in f32
    y = jnp.dot(h.astype(w2_ref.dtype), w2_ref[...],
                preferred_element_type=jnp.float32)
    o_ref[...] = (y + b2_ref[...]).astype(o_ref.dtype)
    # Dropout(p=0.0) is the identity in the forward pass -> nothing to do.


def _ffn_stream_kernel(x_ref, w1_ref, b1_ref, w2_ref, b2_ref, o_ref, acc_ref):
    # Fallback when the weights do not fit the VMEM budget: hidden dim is a trailing
    # "arbitrary" reduction axis; f32 VMEM accumulator; b2 added once in finalize.
    k = pl.program_id(1)

    @pl.when(k == 0)
    def _init():
        acc_ref[...] = jnp.zeros_like(acc_ref)

    xb = x_ref[...].astype(w1_ref.dtype)                         # in-kernel bf16 cast
    h = jnp.dot(xb, w1_ref[...], preferred_element_type=jnp.float32)
    h = jnp.maximum(h + b1_ref[...], 0.0)
    acc_ref[...] += jnp.dot(h.astype(w2_ref.dtype), w2_ref[...],
                            preferred_element_type=jnp.float32)

    @pl.when(k == pl.num_programs(1) - 1)
    def _finalize():
        o_ref[...] = (acc_ref[...] + b2_ref[...]).astype(o_ref.dtype)


# ----------------------------------------------------------------------------
# Wrapper
# ----------------------------------------------------------------------------

@functools.partial(jax.jit,
                   static_argnames=("tm", "th", "out_dtype", "force_stream"))
def feedforward(x, w1, b1, w2, b2, *, tm=512, th=512, out_dtype=None,
                force_stream=False):
    """x: (B, T, n_embd) -> (B, T, n_embd).  w1: (n_embd, 4n), w2: (4n, n_embd)."""
    B, T, n_embd = x.shape
    hidden = w1.shape[1]
    M = B * T
    out_dtype = x.dtype if out_dtype is None else out_dtype

    # Weight/bias dtype normalization.  prepare_params() does this once at init so
    # these are no-ops on the per-call path (no extra HBM cast passes).
    w1c = w1 if w1.dtype == jnp.bfloat16 else w1.astype(jnp.bfloat16)
    w2c = w2 if w2.dtype == jnp.bfloat16 else w2.astype(jnp.bfloat16)
    b1c = b1.reshape(1, hidden).astype(jnp.float32)
    b2c = b2.reshape(1, n_embd).astype(jnp.float32)

    tm, M_pad = _pick_row_tile(M, tm)
    x2 = x.reshape(M, n_embd)
    if M_pad != M:                                   # skip the pad copy when possible
        x2 = jnp.pad(x2, ((0, M_pad - M), (0, 0)))

    budget = _vmem_budget_bytes()
    itemsize_x = x2.dtype.itemsize
    itemsize_o = np.dtype(out_dtype).itemsize
    w_bytes = (w1c.size + w2c.size) * 2              # bf16 weights
    bias_bytes = (b1c.size + b2c.size) * 4
    act_bytes = 2 * tm * n_embd * itemsize_x + 2 * tm * n_embd * itemsize_o
    h_bytes = tm * hidden * 4                        # f32 intermediate inside kernel
    # 2x weights: allow for the pipeline keeping two buffers even for constant blocks.
    resident_need = 2 * w_bytes + 2 * bias_bytes + act_bytes + h_bytes
    use_resident = (not force_stream) and (resident_need <= budget - (4 << 20))

    if use_resident:
        out2 = pl.pallas_call(
            _ffn_resident_kernel,
            out_shape=jax.ShapeDtypeStruct((M_pad, n_embd), out_dtype),
            grid_spec=pltpu.PrefetchScalarGridSpec(
                num_scalar_prefetch=0,
                grid=(M_pad // tm,),
                in_specs=[
                    pl.BlockSpec((tm, n_embd), lambda i: (i, 0)),      # x rows
                    pl.BlockSpec((n_embd, hidden), lambda i: (0, 0)),  # W1 resident
                    pl.BlockSpec((1, hidden), lambda i: (0, 0)),       # b1 resident
                    pl.BlockSpec((hidden, n_embd), lambda i: (0, 0)),  # W2 resident
                    pl.BlockSpec((1, n_embd), lambda i: (0, 0)),       # b2 resident
                ],
                out_specs=pl.BlockSpec((tm, n_embd), lambda i: (i, 0)),
            ),
            compiler_params=pltpu.CompilerParams(
                dimension_semantics=("parallel",),
                vmem_limit_bytes=budget,
            ),
            cost_estimate=pl.CostEstimate(
                flops=4 * M_pad * n_embd * hidden,
                transcendentals=0,
                bytes_accessed=(x2.size * itemsize_x + w_bytes + bias_bytes
                                + M_pad * n_embd * itemsize_o)),
        )(x2, w1c, b1c, w2c, b2c)
    else:
        # Streamed fallback: hidden dim tiled as trailing reduction axis.
        # (On v5e, if profiling shows exposed weight DMA here, pipeline_mode=
        #  pl.Buffered(3) on the W1/W2 specs is the next knob.)
        th = _pick_hidden_tile(hidden, th)
        n_k = hidden // th
        n_row_blocks = M_pad // tm
        out2 = pl.pallas_call(
            _ffn_stream_kernel,
            out_shape=jax.ShapeDtypeStruct((M_pad, n_embd), out_dtype),
            grid_spec=pltpu.PrefetchScalarGridSpec(
                num_scalar_prefetch=0,
                grid=(n_row_blocks, n_k),
                in_specs=[
                    pl.BlockSpec((tm, n_embd), lambda i, k: (i, 0)),   # x rows
                    pl.BlockSpec((n_embd, th), lambda i, k: (0, k)),   # W1 slice
                    pl.BlockSpec((1, th), lambda i, k: (0, k)),        # b1 slice
                    pl.BlockSpec((th, n_embd), lambda i, k: (k, 0)),   # W2 slice
                    pl.BlockSpec((1, n_embd), lambda i, k: (0, 0)),    # b2
                ],
                out_specs=pl.BlockSpec((tm, n_embd), lambda i, k: (i, 0)),
                scratch_shapes=[pltpu.VMEM((tm, n_embd), jnp.float32)],
            ),
            compiler_params=pltpu.CompilerParams(
                dimension_semantics=("parallel", "arbitrary"),
                vmem_limit_bytes=budget,
            ),
            cost_estimate=pl.CostEstimate(
                flops=4 * M_pad * n_embd * hidden,
                transcendentals=0,
                bytes_accessed=(x2.size * itemsize_x
                                + n_row_blocks * w_bytes     # weights re-streamed
                                + bias_bytes
                                + M_pad * n_embd * itemsize_o)),
        )(x2, w1c, b1c, w2c, b2c)

    if M_pad != M:                                   # skip the slice when possible
        out2 = out2[:M]
    return out2.reshape(B, T, n_embd)


# ----------------------------------------------------------------------------
# Params / reference
# ----------------------------------------------------------------------------

def init_params(key, n_embd, dtype=jnp.float32):
    """Deterministic params mimicking nn.Linear default init (U(-1/sqrt(fan_in), +))."""
    hidden = 4 * n_embd
    k1, k2, k3, k4 = jax.random.split(key, 4)
    s1 = 1.0 / (n_embd ** 0.5)
    s2 = 1.0 / (hidden ** 0.5)
    w1 = jax.random.uniform(k1, (n_embd, hidden), dtype, -s1, s1)
    b1 = jax.random.uniform(k2, (hidden,), dtype, -s1, s1)
    w2 = jax.random.uniform(k3, (hidden, n_embd), dtype, -s2, s2)
    b2 = jax.random.uniform(k4, (n_embd,), dtype, -s2, s2)
    return w1, b1, w2, b2


def prepare_params(w1, b1, w2, b2):
    """One-time cast hoisting (perf review): bf16 MXU weights, f32 biases."""
    return (w1.astype(jnp.bfloat16), b1.astype(jnp.float32),
            w2.astype(jnp.bfloat16), b2.astype(jnp.float32))


def _reference(x, w1, b1, w2, b2):
    """Pure-JAX reference matching the kernel numerics (bf16 MXU ops, f32 accumulation)."""
    B, T, n_embd = x.shape
    xb = x.reshape(B * T, n_embd).astype(jnp.bfloat16)
    h = jnp.dot(xb, w1.astype(jnp.bfloat16), preferred_element_type=jnp.float32)
    h = jnp.maximum(h + b1.astype(jnp.float32), 0.0)
    y = jnp.dot(h.astype(jnp.bfloat16), w2.astype(jnp.bfloat16),
                preferred_element_type=jnp.float32) + b2.astype(jnp.float32)
    return y.reshape(B, T, n_embd).astype(x.dtype)


if __name__ == "__main__":
    key = jax.random.PRNGKey(0)

    # Case 1: lane-dense model dim (n_embd multiple of 128).  Weights fit the VMEM
    # budget -> resident single-axis path; M=16 -> tm shrinks to 8 so the parallel
    # row axis has 2 blocks (both v7x TensorCores busy).
    B, T, n_embd = 2, 8, 128
    kx, kp, key = jax.random.split(key, 3)
    x = jax.random.normal(kx, (B, T, n_embd), jnp.float32)
    params = prepare_params(*init_params(kp, n_embd))      # hoisted one-time casts
    out = jax.block_until_ready(feedforward(x, *params))
    ref = _reference(x, *params)
    assert out.shape == (B, T, n_embd)
    assert jnp.allclose(out, ref, atol=1e-3, rtol=1e-3), \
        float(jnp.max(jnp.abs(out - ref)))

    # Case 2: small ragged shape -> exercises row padding (M=14 -> 16) and a sub-128
    # feature dim (masked stores accepted for toy dims; real model dims are lane-dense).
    B2, T2, n_embd2 = 2, 7, 32
    kx2, kp2, key = jax.random.split(key, 3)
    x_s = jax.random.normal(kx2, (B2, T2, n_embd2), jnp.float32)
    params_s = prepare_params(*init_params(kp2, n_embd2))
    out_s = jax.block_until_ready(feedforward(x_s, *params_s))
    ref_s = _reference(x_s, *params_s)
    assert out_s.shape == (B2, T2, n_embd2)
    assert jnp.allclose(out_s, ref_s, atol=1e-3, rtol=1e-3), \
        float(jnp.max(jnp.abs(out_s - ref_s)))

    # Case 3: force the streamed/accumulator fallback (used when weights exceed the
    # VMEM budget) so that code path is also verified to compile and run clean.
    out_f = jax.block_until_ready(feedforward(x, *params, force_stream=True, th=128))
    assert jnp.allclose(out_f, ref, atol=1e-3, rtol=1e-3), \
        float(jnp.max(jnp.abs(out_f - ref)))

    # TODO(synk): remaining TransformerEncoderModel pieces (embedding lookup, multi-head
    # attention, LayerNorm, residuals, mean-pool, output Linear) are not covered by this kernel.
    print("KERNEL_OK")
</pallas_src>

<mosaic_0001>
module attributes {stable_mosaic.version = 11 : i64} {
  func.func @_ffn_resident_kernel(%arg0: i32, %arg1: memref<8x128xf32, #tpu.memory_space<vmem>>, %arg2: memref<128x512xbf16, #tpu.memory_space<vmem>>, %arg3: memref<1x512xf32, #tpu.memory_space<vmem>>, %arg4: memref<512x128xbf16, #tpu.memory_space<vmem>>, %arg5: memref<1x128xf32, #tpu.memory_space<vmem>>, %arg6: memref<8x128xf32, #tpu.memory_space<vmem>>) attributes {dimension_semantics = [#tpu.dimension_semantics<parallel>], iteration_bounds = array<i64: 2>, scalar_prefetch = 0 : i64, scratch_operands = 0 : i64, tpu.core_type = #tpu.core_type<tc>, window_params = [{transform_indices = @transform_0, window_bounds = array<i64: 8, 128>}, {pipeline_mode = #tpu.pipeline_mode<synchronous>, transform_indices = @transform_1, window_bounds = array<i64: 128, 512>}, {pipeline_mode = #tpu.pipeline_mode<synchronous>, transform_indices = @transform_2, window_bounds = array<i64: 1, 512>}, {pipeline_mode = #tpu.pipeline_mode<synchronous>, transform_indices = @transform_3, window_bounds = array<i64: 512, 128>}, {pipeline_mode = #tpu.pipeline_mode<synchronous>, transform_indices = @transform_4, window_bounds = array<i64: 1, 128>}, {transform_indices = @transform_5, window_bounds = array<i64: 8, 128>}]} {
    %c0 = arith.constant 0 : index
    %c0_0 = arith.constant 0 : index
    %0 = vector.load %arg1[%c0, %c0_0] : memref<8x128xf32, #tpu.memory_space<vmem>>, vector<8x128xf32>
    %1 = arith.truncf %0 : vector<8x128xf32> to vector<8x128xbf16>
    %c0_1 = arith.constant 0 : index
    %c0_2 = arith.constant 0 : index
    %2 = vector.load %arg2[%c0_1, %c0_2] : memref<128x512xbf16, #tpu.memory_space<vmem>>, vector<128x512xbf16>
    %cst = arith.constant dense<0.000000e+00> : vector<8x512xf32>
    %3 = tpu.matmul %1, %2, %cst {dimension_numbers = #tpu.dot_dimension_numbers<[1], [0], [0], [1], [0, 0, 1, 1], [], []>} : vector<8x128xbf16>, vector<128x512xbf16>, vector<8x512xf32> -> vector<8x512xf32>
    %c0_3 = arith.constant 0 : index
    %c0_4 = arith.constant 0 : index
    %4 = vector.load %arg3[%c0_3, %c0_4] : memref<1x512xf32, #tpu.memory_space<vmem>>, vector<1x512xf32>
    %5 = vector.broadcast %4 : vector<1x512xf32> to vector<8x512xf32>
    %6 = arith.addf %3, %5 : vector<8x512xf32>
    %cst_5 = arith.constant 0.000000e+00 : f32
    %7 = vector.broadcast %cst_5 : f32 to vector<8x512xf32>
    %8 = arith.maximumf %6, %7 : vector<8x512xf32>
    %9 = arith.truncf %8 : vector<8x512xf32> to vector<8x512xbf16>
    %c0_6 = arith.constant 0 : index
    %c0_7 = arith.constant 0 : index
    %10 = vector.load %arg4[%c0_6, %c0_7] : memref<512x128xbf16, #tpu.memory_space<vmem>>, vector<512x128xbf16>
    %cst_8 = arith.constant dense<0.000000e+00> : vector<8x128xf32>
    %11 = tpu.matmul %9, %10, %cst_8 {dimension_numbers = #tpu.dot_dimension_numbers<[1], [0], [0], [1], [0, 0, 1, 1], [], []>} : vector<8x512xbf16>, vector<512x128xbf16>, vector<8x128xf32> -> vector<8x128xf32>
    %c0_9 = arith.constant 0 : index
    %c0_10 = arith.constant 0 : index
    %12 = vector.load %arg5[%c0_9, %c0_10] : memref<1x128xf32, #tpu.memory_space<vmem>>, vector<1x128xf32>
    %13 = vector.broadcast %12 : vector<1x128xf32> to vector<8x128xf32>
    %14 = arith.addf %11, %13 : vector<8x128xf32>
    %c0_11 = arith.constant 0 : index
    %c0_12 = arith.constant 0 : index
    %15 = vector.load %arg6[%c0_11, %c0_12] : memref<8x128xf32, #tpu.memory_space<vmem>>, vector<8x128xf32>
    tpu.vector_store %arg6[%c0_11, %c0_12], %14 {strides = array<i32>} : memref<8x128xf32, #tpu.memory_space<vmem>>, vector<8x128xf32>,
    return
  }
  func.func @transform_0(%arg0: i32) -> (i32, i32) {
    %c0_i32 = arith.constant 0 : i32
    %c0_i32_0 = arith.constant 0 : i32
    return %arg0, %c0_i32 : i32, i32
  }
  func.func @transform_1(%arg0: i32) -> (i32, i32) {
    %c0_i32 = arith.constant 0 : i32
    %c0_i32_0 = arith.constant 0 : i32
    %c0_i32_1 = arith.constant 0 : i32
    return %c0_i32, %c0_i32_0 : i32, i32
  }
  func.func @transform_2(%arg0: i32) -> (i32, i32) {
    %c0_i32 = arith.constant 0 : i32
    %c0_i32_0 = arith.constant 0 : i32
    %c0_i32_1 = arith.constant 0 : i32
    return %c0_i32, %c0_i32_0 : i32, i32
  }
  func.func @transform_3(%arg0: i32) -> (i32, i32) {
    %c0_i32 = arith.constant 0 : i32
    %c0_i32_0 = arith.constant 0 : i32
    %c0_i32_1 = arith.constant 0 : i32
    return %c0_i32, %c0_i32_0 : i32, i32
  }
  func.func @transform_4(%arg0: i32) -> (i32, i32) {
    %c0_i32 = arith.constant 0 : i32
    %c0_i32_0 = arith.constant 0 : i32
    %c0_i32_1 = arith.constant 0 : i32
    return %c0_i32, %c0_i32_0 : i32, i32
  }
  func.func @transform_5(%arg0: i32) -> (i32, i32) {
    %c0_i32 = arith.constant 0 : i32
    %c0_i32_0 = arith.constant 0 : i32
    return %arg0, %c0_i32 : i32, i32
  }
}

</mosaic_0001>

<llo_original>
// kernel: feedforward.1
$region0: #{feedforward.1}
  #allocation0 [shape = 'u32[]', space=smem, size = 0x4, offset = 0x4, fixed_abs, tag = 'smem constant byte address 0x4 - core index']
  #allocation1 [shape = 'u32[144,128]{1,0:T(1,128)}', space=vmem, size = 0x12000, scoped, tag = 'internal scratch']
  %s0 = inlined_call_operand.hbm [shape: f32[16,128], index: 0, kind: input, shape index: {}]
  %s1 = inlined_call_operand.hbm [shape: bf16[128,512], index: 1, kind: input, shape index: {}]
  %s2 = inlined_call_operand.vmem [shape: f32[1,512], index: 2, kind: input, shape index: {}]
  %s3 = inlined_call_operand.hbm [shape: bf16[512,128], index: 3, kind: input, shape index: {}]
  %s4 = inlined_call_operand.vmem [shape: f32[1,128], index: 4, kind: input, shape index: {}]
  %s5 = inlined_call_operand.hbm [shape: f32[16,128], index: 5, kind: output, shape index: {}]
  %s6 = sld [smem:[#allocation0]]
  $region65: #{feedforward.1} parent=0
    _
  %s8 = ssub.s32 1, %s6
  %s9 = scalar_select 0, %s8, %s6
  $region1: #{feedforward.1} parent=0
    #allocation2 [shape = 'u8[8192]{0}', space=vmem, size = 0x2000, scoped, tag = 'input window, operand 0']
    #allocation3 [shape = 's32[2]{0}', space=sflag, size = 0x8, scoped, tag = 'scoped memory for feedforward.1']
    #allocation4 [shape = 's32[2]{0}', space=sflag, size = 0x8, scoped, tag = 'scoped memory for feedforward.1']
    #allocation5 [shape = 'u8[131072]{0}', space=vmem, size = 0x20000, scoped, tag = 'input window, operand 1, single buffered']
    #allocation6 [shape = 's32[1]{0}', space=sflag, size = 0x4, scoped, tag = 'scoped memory for feedforward.1']
    #allocation7 [shape = 'u8[131072]{0}', space=vmem, size = 0x20000, scoped, tag = 'input window, operand 3, single buffered']
    #allocation8 [shape = 'u8[8192]{0}', space=vmem, size = 0x2000, scoped, tag = 'output window, operand 0']
    %10 = vsyncpa [#allocation3], 0
    %s11 = scalar_lea.sflag [#allocation3], 1
    %12 = vsyncpa %s11, 0
    %13 = vsyncpa [#allocation6], 0
    %14 = vsyncpa [#allocation4], 0
    %s15 = scalar_lea.sflag [#allocation4], 1
    %16 = vsyncpa %s15, 0
    loop: start=0, step=1, limit=4
    $region2: #{feedforward.1} parent=1 // loop_pre_header
      _
    $region3: #{feedforward.1} parent=1 // loop_header
      %s18 = sphi 0, %s22
      %p19 = scmp.ge.s32.totalorder %s18, 4
      %s28 = sphi 0, %s30
      %s31 = sphi 0, %s28
      %s32 = sphi 0, %s31
      %s48 = sphi 0, %s32
      %s52 = sphi 0, %s52
      %s54 = sphi 0, %s52
      %s55 = sphi 0, %s54
      %s69 = sphi 0, %s55
      %s73 = sphi 0, %s73
      %s75 = sphi 0, %s73
      %s76 = sphi 0, %s75
      %s90 = sphi 0, %s76
      %s94 = sphi 0, %s94
      %s96 = sphi 0, %s94
      %s97 = sphi 0, %s96
      %s111 = sphi 0, %s97
      %s115 = sphi 0, %s115
      %s117 = sphi 0, %s115
      %s118 = sphi 0, %s117
      %s132 = sphi 0, %s118
      %s138 = sphi 0, %s140
      %s141 = sphi 0, %s138
      %s142 = sphi 0, %s141
      %s158 = sphi 0, %s142
    $region4: #{feedforward.1} parent=1 // loop_header_branch
      %21 = sbr.rel (%p19) target = $region8
    $region5: #{feedforward.1} parent=1 // loop_body
      %s23 = ssub.s32 %s18, 1
      %s24 = ssub.s32 %s18, 2
      %s25 = sadd.s32 %s18, 1
      %s26 = ssub.s32 %s18, %s25
      %p27 = scmp.eq.s32.totalorder %s26, 0
      %s29 = sadd.s32 %s28, 1
      %s30 = scalar_select %p27, %s28, %s29
      %p33 = pneg %p27
      %p34 = scmp.eq.s32.totalorder %s18, 1
      %p35 = por %p33, %p34
      %p36 = scmp.ne.s32.totalorder %s28, %s31
      %p37 = scmp.eq.s32.totalorder %s18, 0
      %p38 = por %p36, %p37
      %p39 = scmp.ne.s32.totalorder %s28, %s31
      %p40 = scmp.eq.s32.totalorder %s23, 1
      %p41 = por %p39, %p40
      %p42 = scmp.ne.s32.totalorder %s31, %s32
      %p43 = scmp.eq.s32.totalorder %s23, 0
      %p44 = por %p42, %p43
      %p45 = scmp.ne.s32.totalorder %s31, %s32
      %p46 = scmp.eq.s32.totalorder %s24, 1
      %p47 = por %p45, %p46
      %p49 = scmp.ne.s32.totalorder %s32, %s48
      %p50 = scmp.eq.s32.totalorder %s24, 0
      %p51 = por %p49, %p50
      %s53 = sadd.s32 %s52, 1
      %p56 = scmp.eq.s32.totalorder %s18, 1
      %p57 = scmp.ne.s32.totalorder %s52, %s54
      %p58 = scmp.eq.s32.totalorder %s18, 0
      %p59 = por %p57, %p58
      %p60 = scmp.ne.s32.totalorder %s52, %s54
      %p61 = scmp.eq.s32.totalorder %s23, 1
      %p62 = por %p60, %p61
      %p63 = scmp.ne.s32.totalorder %s54, %s55
      %p64 = scmp.eq.s32.totalorder %s23, 0
      %p65 = por %p63, %p64
      %p66 = scmp.ne.s32.totalorder %s54, %s55
      %p67 = scmp.eq.s32.totalorder %s24, 1
      %p68 = por %p66, %p67
      %p70 = scmp.ne.s32.totalorder %s55, %s69
      %p71 = scmp.eq.s32.totalorder %s24, 0
      %p72 = por %p70, %p71
      %s74 = sadd.s32 %s73, 1
      %p77 = scmp.eq.s32.totalorder %s18, 1
      %p78 = scmp.ne.s32.totalorder %s73, %s75
      %p79 = scmp.eq.s32.totalorder %s18, 0
      %p80 = por %p78, %p79
      %p81 = scmp.ne.s32.totalorder %s73, %s75
      %p82 = scmp.eq.s32.totalorder %s23, 1
      %p83 = por %p81, %p82
      %p84 = scmp.ne.s32.totalorder %s75, %s76
      %p85 = scmp.eq.s32.totalorder %s23, 0
      %p86 = por %p84, %p85
      %p87 = scmp.ne.s32.totalorder %s75, %s76
      %p88 = scmp.eq.s32.totalorder %s24, 1
      %p89 = por %p87, %p88
      %p91 = scmp.ne.s32.totalorder %s76, %s90
      %p92 = scmp.eq.s32.totalorder %s24, 0
      %p93 = por %p91, %p92
      %s95 = sadd.s32 %s94, 1
      %p98 = scmp.eq.s32.totalorder %s18, 1
      %p99 = scmp.ne.s32.totalorder %s94, %s96
      %p100 = scmp.eq.s32.totalorder %s18, 0
      %p101 = por %p99, %p100
      %p102 = scmp.ne.s32.totalorder %s94, %s96
      %p103 = scmp.eq.s32.totalorder %s23, 1
      %p104 = por %p102, %p103
      %p105 = scmp.ne.s32.totalorder %s96, %s97
      %p106 = scmp.eq.s32.totalorder %s23, 0
      %p107 = por %p105, %p106
      %p108 = scmp.ne.s32.totalorder %s96, %s97
      %p109 = scmp.eq.s32.totalorder %s24, 1
      %p110 = por %p108, %p109
      %p112 = scmp.ne.s32.totalorder %s97, %s111
      %p113 = scmp.eq.s32.totalorder %s24, 0
      %p114 = por %p112, %p113
      %s116 = sadd.s32 %s115, 1
      %p119 = scmp.eq.s32.totalorder %s18, 1
      %p120 = scmp.ne.s32.totalorder %s115, %s117
      %p121 = scmp.eq.s32.totalorder %s18, 0
      %p122 = por %p120, %p121
      %p123 = scmp.ne.s32.totalorder %s115, %s117
      %p124 = scmp.eq.s32.totalorder %s23, 1
      %p125 = por %p123, %p124
      %p126 = scmp.ne.s32.totalorder %s117, %s118
      %p127 = scmp.eq.s32.totalorder %s23, 0
      %p128 = por %p126, %p127
      %p129 = scmp.ne.s32.totalorder %s117, %s118
      %p130 = scmp.eq.s32.totalorder %s24, 1
      %p131 = por %p129, %p130
      %p133 = scmp.ne.s32.totalorder %s118, %s132
      %p134 = scmp.eq.s32.totalorder %s24, 0
      %p135 = por %p133, %p134
      %s136 = ssub.s32 %s18, %s25
      %p137 = scmp.eq.s32.totalorder %s136, 0
      %s139 = sadd.s32 %s138, 1
      %s140 = scalar_select %p137, %s138, %s139
      %p143 = pneg %p137
      %p144 = scmp.eq.s32.totalorder %s18, 1
      %p145 = por %p143, %p144
      %p146 = scmp.ne.s32.totalorder %s138, %s141
      %p147 = scmp.eq.s32.totalorder %s18, 0
      %p148 = por %p146, %p147
      %p149 = scmp.ne.s32.totalorder %s138, %s141
      %p150 = scmp.eq.s32.totalorder %s23, 1
      %p151 = por %p149, %p150
      %p152 = scmp.ne.s32.totalorder %s141, %s142
      %p153 = scmp.eq.s32.totalorder %s23, 0
      %p154 = por %p152, %p153
      %p155 = scmp.ne.s32.totalorder %s141, %s142
      %p156 = scmp.eq.s32.totalorder %s24, 1
      %p157 = por %p155, %p156
      %p159 = scmp.ne.s32.totalorder %s142, %s158
      %p160 = scmp.eq.s32.totalorder %s24, 0
      %p161 = por %p159, %p160
      %p162 = scmp.le.s32.totalorder 1, %s18
      %p163 = scmp.lt.s32.totalorder %s18, 3
      %p164 = pnand %p162, %p163
      %p165 = pneg %p164
      // Predicated region
      $region9: #{feedforward.1} parent=5 // pred_check
        _
      $region10: #{feedforward.1} parent=5 // pred_check_branch
        %167 = sbr.rel (%p164) target = $region12
      $region11: #{feedforward.1} parent=5 // pred_region
        %s168 = ssub.s32 %s18, 1
        // Predicated region
        $region13: #{feedforward.1} parent=11 // pred_check
          %p169 = pneg %p65
        $region14: #{feedforward.1} parent=11 // pred_check_branch
          %171 = sbr.rel (%p169) target = $region16
        $region15: #{feedforward.1} parent=11 // pred_region
          %s173 = ssub.s32 4096, 4096
          %174 = vsyncadd [#allocation6], %s173
          %s175 = sshll.u32 [#allocation5], 4
          %s176 = int_to_ptr.vmem [resolvable:$true] %s175
          %181 = dma.hbm_to_vmem [thread:$0]  %s1, 4096, %s176, [#allocation6], 256, 256, 16
        $region16: #{feedforward.1} parent=11 // pred_fallthru
          _
        // Predicated region
        $region17: #{feedforward.1} parent=11 // pred_check
          %p182 = pneg %p86
        $region18: #{feedforward.1} parent=11 // pred_check_branch
          %184 = sbr.rel (%p182) target = $region20
        $region19: #{feedforward.1} parent=11 // pred_region
          _
        $region20: #{feedforward.1} parent=11 // pred_fallthru
          _
        // Predicated region
        $region21: #{feedforward.1} parent=11 // pred_check
          %p185 = pneg %p107
        $region22: #{feedforward.1} parent=11 // pred_check_branch
          %187 = sbr.rel (%p185) target = $region24
        $region23: #{feedforward.1} parent=11 // pred_region
          %s189 = ssub.s32 4096, 4096
          %190 = vsyncadd [#allocation6], %s189
          %s191 = sshll.u32 [#allocation7], 4
          %s192 = int_to_ptr.vmem [resolvable:$true] %s191
          %197 = dma.hbm_to_vmem [thread:$0]  %s3, 4096, %s192, [#allocation6], 64, 64, 4
        $region24: #{feedforward.1} parent=11 // pred_fallthru
          _
        // Predicated region
        $region25: #{feedforward.1} parent=11 // pred_check
          %p198 = pneg %p128
        $region26: #{feedforward.1} parent=11 // pred_check_branch
          %200 = sbr.rel (%p198) target = $region28
        $region27: #{feedforward.1} parent=11 // pred_region
          _
        $region28: #{feedforward.1} parent=11 // pred_fallthru
          _
      $region12: #{feedforward.1} parent=5 // pred_fallthru
        _
      %p201 = scmp.lt.s32.totalorder %s18, 2
      // Predicated region
      $region29: #{feedforward.1} parent=5 // pred_check
        %p202 = pneg %p201
      $region30: #{feedforward.1} parent=5 // pred_check_branch
        %204 = sbr.rel (%p202) target = $region32
      $region31: #{feedforward.1} parent=5 // pred_region
        // Predicated region
        $region33: #{feedforward.1} parent=31 // pred_check
          %p205 = pneg %p38
        $region34: #{feedforward.1} parent=31 // pred_check_branch
          %207 = sbr.rel (%p205) target = $region36
        $region35: #{feedforward.1} parent=31 // pred_region
          %s208 = sand.u32 %s28, 1
          %s209 = scalar_lea.sflag [#allocation3], %s208
          %s210 = sand.u32 %s28, 1
          %s211 = smul.addr %s210, 8
          %s212 = scalar_lea.vmem [#allocation2], %s211
          %s214 = ssub.s32 128, 128
          %215 = vsyncadd %s209, %s214
          %s216 = smul.addr %s18, 128
          %s217 = scalar_lea.hbm %s0, %s216
          %s219 = sshll.u32 %s212, 4
          %s220 = int_to_ptr.vmem [resolvable:$true] %s219
          %222 = dma.hbm_to_vmem [thread:$0]  %s217, 128, %s220, %s209
        $region36: #{feedforward.1} parent=31 // pred_fallthru
          _
      $region32: #{feedforward.1} parent=5 // pred_fallthru
        _
      %p223 = scmp.le.s32.totalorder 1, %s18
      %p224 = scmp.lt.s32.totalorder %s18, 3
      %p225 = pnand %p223, %p224
      %p226 = pneg %p225
      // Predicated region
      $region37: #{feedforward.1} parent=5 // pred_check
        _
      $region38: #{feedforward.1} parent=5 // pred_check_branch
        %228 = sbr.rel (%p225) target = $region40
      $region39: #{feedforward.1} parent=5 // pred_region
        %s229 = ssub.s32 %s18, 1
        %s230 = sand.u32 %s31, 1
        %s231 = scalar_lea.sflag [#allocation3], %s230
        %s232 = sand.u32 %s31, 1
        %s233 = smul.addr %s232, 8
        %s234 = scalar_lea.vmem [#allocation2], %s233
        // Predicated region
        $region41: #{feedforward.1} parent=39 // pred_check
          %p235 = pneg %p44
        $region42: #{feedforward.1} parent=39 // pred_check_branch
          %237 = sbr.rel (%p235) target = $region44
        $region43: #{feedforward.1} parent=39 // pred_region
          %238 = dma.done %s231, 128
        $region44: #{feedforward.1} parent=39 // pred_fallthru
          _
        // Predicated region
        $region45: #{feedforward.1} parent=39 // pred_check
          %p239 = pneg %p65
        $region46: #{feedforward.1} parent=39 // pred_check_branch
          %241 = sbr.rel (%p239) target = $region48
        $region47: #{feedforward.1} parent=39 // pred_region
          %242 = dma.done [#allocation6], 4096
        $region48: #{feedforward.1} parent=39 // pred_fallthru
          _
        // Predicated region
        $region49: #{feedforward.1} parent=39 // pred_check
          %p243 = pneg %p107
        $region50: #{feedforward.1} parent=39 // pred_check_branch
          %245 = sbr.rel (%p243) target = $region52
        $region51: #{feedforward.1} parent=39 // pred_region
          %246 = dma.done [#allocation6], 4096
        $region52: #{feedforward.1} parent=39 // pred_fallthru
          _
        %s247 = sand.u32 %s31, 1
        %s248 = scalar_lea.sflag [#allocation3], %s247
        %s249 = sand.u32 %s31, 1
        %s250 = smul.addr %s249, 8
        %s251 = scalar_lea.vmem [#allocation2], %s250
        %p252 = pneg %p44
        %p253 = pneg %p41
        %p254 = pneg %p65
        %p255 = pneg %p62
        %p256 = pneg %p86
        %p257 = pneg %p83
        %p258 = pneg %p107
        %p259 = pneg %p104
        %p260 = pneg %p128
        %p261 = pneg %p125
        %p262 = pneg %p154
        %p263 = pneg %p151
        %s264 = sand.u32 %s141, 1
        %s265 = scalar_lea.sflag [#allocation4], %s264
        %s266 = sand.u32 %s141, 1
        %s267 = smul.addr %s266, 8
        %s268 = scalar_lea.vmem [#allocation8], %s267
        %v270 = vld [vmem:[%s234] sm:$0xff]
        %v271 = vpack.c.bf16 %v270, %v270
        %v272 = vld [vmem:[#allocation5] sm:$0xff]
        %v273 = vld [vmem:[#allocation5 + $0x8] sm:$0xff]
        %v274 = vld [vmem:[#allocation5 + $0x10] sm:$0xff]
        %v275 = vld [vmem:[#allocation5 + $0x18] sm:$0xff]
        %v276 = vld [vmem:[#allocation5 + $0x20] sm:$0xff]
        %v277 = vld [vmem:[#allocation5 + $0x28] sm:$0xff]
        %v278 = vld [vmem:[#allocation5 + $0x30] sm:$0xff]
        %v279 = vld [vmem:[#allocation5 + $0x38] sm:$0xff]
        %v280 = vld [vmem:[#allocation5 + $0x40] sm:$0xff]
        %v281 = vld [vmem:[#allocation5 + $0x48] sm:$0xff]
        %v282 = vld [vmem:[#allocation5 + $0x50] sm:$0xff]
        %v283 = vld [vmem:[#allocation5 + $0x58] sm:$0xff]
        %v284 = vld [vmem:[#allocation5 + $0x60] sm:$0xff]
        %v285 = vld [vmem:[#allocation5 + $0x68] sm:$0xff]
        %v286 = vld [vmem:[#allocation5 + $0x70] sm:$0xff]
        %v287 = vld [vmem:[#allocation5 + $0x78] sm:$0xff]
        %v288 = vld [vmem:[#allocation5 + $0x80] sm:$0xff]
        %v289 = vld [vmem:[#allocation5 + $0x88] sm:$0xff]
        %v290 = vld [vmem:[#allocation5 + $0x90] sm:$0xff]
        %v291 = vld [vmem:[#allocation5 + $0x98] sm:$0xff]
        %v292 = vld [vmem:[#allocation5 + $0xa0] sm:$0xff]
        %v293 = vld [vmem:[#allocation5 + $0xa8] sm:$0xff]
        %v294 = vld [vmem:[#allocation5 + $0xb0] sm:$0xff]
        %v295 = vld [vmem:[#allocation5 + $0xb8] sm:$0xff]
        %v296 = vld [vmem:[#allocation5 + $0xc0] sm:$0xff]
        %v297 = vld [vmem:[#allocation5 + $0xc8] sm:$0xff]
        %v298 = vld [vmem:[#allocation5 + $0xd0] sm:$0xff]
        %v299 = vld [vmem:[#allocation5 + $0xd8] sm:$0xff]
        %v300 = vld [vmem:[#allocation5 + $0xe0] sm:$0xff]
        %v301 = vld [vmem:[#allocation5 + $0xe8] sm:$0xff]
        %v302 = vld [vmem:[#allocation5 + $0xf0] sm:$0xff]
        %v303 = vld [vmem:[#allocation5 + $0xf8] sm:$0xff]
        %v304 = vld [vmem:[%s2] sm:$0xf]
        %v306 = vlaneseq
        %v307 = vshrl.u32 %v306, 7
        %v308 = vsub.s32 0, %v307
        %v309 = vrot.slane %v304, %v308
        %v310 = vlaneseq
        %v311 = vshrl.u32 %v310, 7
        %v312 = vsub.s32 1, %v311
        %v313 = vrot.slane %v304, %v312
        %v314 = vlaneseq
        %v315 = vshrl.u32 %v314, 7
        %v316 = vsub.s32 2, %v315
        %v317 = vrot.slane %v304, %v316
        %v318 = vlaneseq
        %v319 = vshrl.u32 %v318, 7
        %v320 = vsub.s32 3, %v319
        %v321 = vrot.slane %v304, %v320
        %v358 = vunpack.c.l.b16 %v272
        %v359 = vunpack.c.h.b16 %v272
        %v360 = vunpack.c.l.b16 %v273
        %v361 = vunpack.c.h.b16 %v273
        %v362 = vunpack.c.l.b16 %v274
        %v363 = vunpack.c.h.b16 %v274
        %v364 = vunpack.c.l.b16 %v275
        %v365 = vunpack.c.h.b16 %v275
        %v366 = vunpack.c.l.b16 %v276
        %v367 = vunpack.c.h.b16 %v276
        %v368 = vunpack.c.l.b16 %v277
        %v369 = vunpack.c.h.b16 %v277
        %v370 = vunpack.c.l.b16 %v278
        %v371 = vunpack.c.h.b16 %v278
        %v372 = vunpack.c.l.b16 %v279
        %v373 = vunpack.c.h.b16 %v279
        %v374 = vunpack.c.l.b16 %v280
        %v375 = vunpack.c.h.b16 %v280
        %v376 = vunpack.c.l.b16 %v281
        %v377 = vunpack.c.h.b16 %v281
        %v378 = vunpack.c.l.b16 %v282
        %v379 = vunpack.c.h.b16 %v282
        %v380 = vunpack.c.l.b16 %v283
        %v381 = vunpack.c.h.b16 %v283
        %v382 = vunpack.c.l.b16 %v284
        %v383 = vunpack.c.h.b16 %v284
        %v384 = vunpack.c.l.b16 %v285
        %v385 = vunpack.c.h.b16 %v285
        %v386 = vunpack.c.l.b16 %v286
        %v387 = vunpack.c.h.b16 %v286
        %v388 = vunpack.c.l.b16 %v287
        %v389 = vunpack.c.h.b16 %v287
        %v390 = vunpack.c.l.b16 %v288
        %v391 = vunpack.c.h.b16 %v288
        %v392 = vunpack.c.l.b16 %v289
        %v393 = vunpack.c.h.b16 %v289
        %v394 = vunpack.c.l.b16 %v290
        %v395 = vunpack.c.h.b16 %v290
        %v396 = vunpack.c.l.b16 %v291
        %v397 = vunpack.c.h.b16 %v291
        %v398 = vunpack.c.l.b16 %v292
        %v399 = vunpack.c.h.b16 %v292
        %v400 = vunpack.c.l.b16 %v293
        %v401 = vunpack.c.h.b16 %v293
        %v402 = vunpack.c.l.b16 %v294
        %v403 = vunpack.c.h.b16 %v294
        %v404 = vunpack.c.l.b16 %v295
        %v405 = vunpack.c.h.b16 %v295
        %v406 = vunpack.c.l.b16 %v296
        %v407 = vunpack.c.h.b16 %v296
        %v408 = vunpack.c.l.b16 %v297
        %v409 = vunpack.c.h.b16 %v297
        %v410 = vunpack.c.l.b16 %v298
        %v411 = vunpack.c.h.b16 %v298
        %v412 = vunpack.c.l.b16 %v299
        %v413 = vunpack.c.h.b16 %v299
        %v414 = vunpack.c.l.b16 %v300
        %v415 = vunpack.c.h.b16 %v300
        %v416 = vunpack.c.l.b16 %v301
        %v417 = vunpack.c.h.b16 %v301
        %v418 = vunpack.c.l.b16 %v302
        %v419 = vunpack.c.h.b16 %v302
        %v420 = vunpack.c.l.b16 %v303
        %v421 = vunpack.c.h.b16 %v303
        %v422 = vpack.c.b16 %v362, %v358
        %v423 = vpack.c.b16 %v363, %v359
        %v424 = vpack.c.b16 %v364, %v360
        %v425 = vpack.c.b16 %v365, %v361
        %v426 = vpack.c.b16 %v370, %v366
        %v427 = vpack.c.b16 %v371, %v367
        %v428 = vpack.c.b16 %v372, %v368
        %v429 = vpack.c.b16 %v373, %v369
        %v430 = vpack.c.b16 %v378, %v374
        %v431 = vpack.c.b16 %v379, %v375
        %v432 = vpack.c.b16 %v380, %v376
        %v433 = vpack.c.b16 %v381, %v377
        %v434 = vpack.c.b16 %v386, %v382
        %v435 = vpack.c.b16 %v387, %v383
        %v436 = vpack.c.b16 %v388, %v384
        %v437 = vpack.c.b16 %v389, %v385
        %v438 = vpack.c.b16 %v394, %v390
        %v439 = vpack.c.b16 %v395, %v391
        %v440 = vpack.c.b16 %v396, %v392
        %v441 = vpack.c.b16 %v397, %v393
        %v442 = vpack.c.b16 %v402, %v398
        %v443 = vpack.c.b16 %v403, %v399
        %v444 = vpack.c.b16 %v404, %v400
        %v445 = vpack.c.b16 %v405, %v401
        %v446 = vpack.c.b16 %v410, %v406
        %v447 = vpack.c.b16 %v411, %v407
        %v448 = vpack.c.b16 %v412, %v408
        %v449 = vpack.c.b16 %v413, %v409
        %v450 = vpack.c.b16 %v418, %v414
        %v451 = vpack.c.b16 %v419, %v415
        %v452 = vpack.c.b16 %v420, %v416
        %v453 = vpack.c.b16 %v421, %v417
        %486 = vmatprep.subr.bf16.mxu0 %v451
        %487 = vmatpush1.bf16.msra.mxu0 %v450
        %488 = vmatprep.subr.bf16.mxu0 %v447
        %489 = vmatpush1.bf16.msra.mxu0 %v446
        %490 = vmatprep.subr.bf16.mxu0 %v443
        %491 = vmatpush1.bf16.msra.mxu0 %v442
        %492 = vmatprep.subr.bf16.mxu0 %v439
        %493 = vmatpush1.bf16.msra.mxu0 %v438
        %494 = vmatprep.subr.bf16.mxu0 %v435
        %495 = vmatpush1.bf16.msra.mxu0 %v434
        %496 = vmatprep.subr.bf16.mxu0 %v431
        %497 = vmatpush1.bf16.msra.mxu0 %v430
        %498 = vmatprep.subr.bf16.mxu0 %v427
        %499 = vmatpush1.bf16.msra.mxu0 %v426
        %500 = vmatprep.subr.bf16.mxu0 %v423
        %501 = vmatpush1.bf16.msra.mxu0 %v422
        %502 = vmatprep.subr.bf16.mxu0 0
        %503 = vmatpush2.bf16.msra.mxu0 0
        %504 = vmatprep.subr.bf16.mxu0 0
        %505 = vmatpush2.bf16.msra.mxu0 0
        %506 = vmatprep.subr.bf16.mxu0 0
        %507 = vmatpush2.bf16.msra.mxu0 0
        %508 = vmatprep.subr.bf16.mxu0 0
        %509 = vmatpush2.bf16.msra.mxu0 0
        %510 = vmatprep.subr.bf16.mxu0 0
        %511 = vmatpush2.bf16.msra.mxu0 0
        %512 = vmatprep.subr.bf16.mxu0 0
        %513 = vmatpush2.bf16.msra.mxu0 0
        %514 = vmatprep.subr.bf16.mxu0 0
        %515 = vmatpush2.bf16.msra.mxu0 0
        %516 = vmatprep.subr.bf16.mxu0 0
        %517 = vmatpush2.bf16.msra.mxu0 0
        %518 = vmatprep.mubr.bf16.mxu0 0
        %519 = vmatmul.mubr.bf16.gmra.mxu0 %v271
        %v520 = vpop.f32.mrf.mxu0
        %v521 = vadd.f32 %v309, %v520
        %v522 = vpop.f32.mrf.mxu0
        %v523 = vadd.f32 %v313, %v522
        %v524 = vpop.f32.mrf.mxu0
        %v525 = vpop.f32.mrf.mxu0
        %526 = vdwg.mxu0
        %527 = vmatprep.subr.bf16.mxu0 %v453
        %528 = vmatpush1.bf16.msra.mxu0 %v452
        %529 = vmatprep.subr.bf16.mxu0 %v449
        %530 = vmatpush1.bf16.msra.mxu0 %v448
        %531 = vmatprep.subr.bf16.mxu0 %v445
        %532 = vmatpush1.bf16.msra.mxu0 %v444
        %533 = vmatprep.subr.bf16.mxu0 %v441
        %534 = vmatpush1.bf16.msra.mxu0 %v440
        %535 = vmatprep.subr.bf16.mxu0 %v437
        %536 = vmatpush1.bf16.msra.mxu0 %v436
        %537 = vmatprep.subr.bf16.mxu0 %v433
        %538 = vmatpush1.bf16.msra.mxu0 %v432
        %539 = vmatprep.subr.bf16.mxu0 %v429
        %540 = vmatpush1.bf16.msra.mxu0 %v428
        %541 = vmatprep.subr.bf16.mxu0 %v425
        %542 = vmatpush1.bf16.msra.mxu0 %v424
        %543 = vmatprep.subr.bf16.mxu0 0
        %544 = vmatpush2.bf16.msra.mxu0 0
        %545 = vmatprep.subr.bf16.mxu0 0
        %546 = vmatpush2.bf16.msra.mxu0 0
        %547 = vmatprep.subr.bf16.mxu0 0
        %548 = vmatpush2.bf16.msra.mxu0 0
        %549 = vmatprep.subr.bf16.mxu0 0
        %550 = vmatpush2.bf16.msra.mxu0 0
        %551 = vmatprep.subr.bf16.mxu0 0
        %552 = vmatpush2.bf16.msra.mxu0 0
        %553 = vmatprep.subr.bf16.mxu0 0
        %554 = vmatpush2.bf16.msra.mxu0 0
        %555 = vmatprep.subr.bf16.mxu0 0
        %556 = vmatpush2.bf16.msra.mxu0 0
        %557 = vmatprep.subr.bf16.mxu0 0
        %558 = vmatpush2.bf16.msra.mxu0 0
        %559 = vmatprep.mubr.bf16.mxu0 0
        %560 = vmatmul.mubr.bf16.gmra.mxu0 %v271
        %v561 = vpop.f32.mrf.mxu0
        %v562 = vadd.f32 %v317, %v561
        %v563 = vpop.f32.mrf.mxu0
        %v564 = vadd.f32 %v321, %v563
        %v565 = vpop.f32.mrf.mxu0
        %v566 = vpop.f32.mrf.mxu0
        %567 = vdwg.mxu0
        %v568 = vmax.f32 %v521, 0.0
        %v569 = vmax.f32 %v523, 0.0
        %v570 = vmax.f32 %v562, 0.0
        %v571 = vmax.f32 %v564, 0.0
        %v572 = vpack.c.bf16 %v568, %v568
        %v573 = vpack.c.bf16 %v569, %v569
        %v574 = vpack.c.bf16 %v570, %v570
        %v575 = vpack.c.bf16 %v571, %v571
        %v576 = vld [vmem:[#allocation7] sm:$0xf]
        %v577 = vld [vmem:[#allocation7 + $0x4] sm:$0xf]
        %v578 = vld [vmem:[#allocation7 + $0x8] sm:$0xf]
        %v579 = vld [vmem:[#allocation7 + $0xc] sm:$0xf]
        %v580 = vld [vmem:[#allocation7 + $0x10] sm:$0xf]
        %v581 = vld [vmem:[#allocation7 + $0x14] sm:$0xf]
        %v582 = vld [vmem:[#allocation7 + $0x18] sm:$0xf]
        %v583 = vld [vmem:[#allocation7 + $0x1c] sm:$0xf]
        %v584 = vld [vmem:[#allocation7 + $0x20] sm:$0xf]
        %v585 = vld [vmem:[#allocation7 + $0x24] sm:$0xf]
        %v586 = vld [vmem:[#allocation7 + $0x28] sm:$0xf]
        %v587 = vld [vmem:[#allocation7 + $0x2c] sm:$0xf]
        %v588 = vld [vmem:[#allocation7 + $0x30] sm:$0xf]
        %v589 = vld [vmem:[#allocation7 + $0x34] sm:$0xf]
        %v590 = vld [vmem:[#allocation7 + $0x38] sm:$0xf]
        %v591 = vld [vmem:[#allocation7 + $0x3c] sm:$0xf]
        %v592 = vld [vmem:[#allocation7 + $0x40] sm:$0xf]
        %v593 = vld [vmem:[#allocation7 + $0x44] sm:$0xf]
        %v594 = vld [vmem:[#allocation7 + $0x48] sm:$0xf]
        %v595 = vld [vmem:[#allocation7 + $0x4c] sm:$0xf]
        %v596 = vld [vmem:[#allocation7 + $0x50] sm:$0xf]
        %v597 = vld [vmem:[#allocation7 + $0x54] sm:$0xf]
        %v598 = vld [vmem:[#allocation7 + $0x58] sm:$0xf]
        %v599 = vld [vmem:[#allocation7 + $0x5c] sm:$0xf]
        %v600 = vld [vmem:[#allocation7 + $0x60] sm:$0xf]
        %v601 = vld [vmem:[#allocation7 + $0x64] sm:$0xf]
        %v602 = vld [vmem:[#allocation7 + $0x68] sm:$0xf]
        %v603 = vld [vmem:[#allocation7 + $0x6c] sm:$0xf]
        %v604 = vld [vmem:[#allocation7 + $0x70] sm:$0xf]
        %v605 = vld [vmem:[#allocation7 + $0x74] sm:$0xf]
        %v606 = vld [vmem:[#allocation7 + $0x78] sm:$0xf]
        %v607 = vld [vmem:[#allocation7 + $0x7c] sm:$0xf]
        %v608 = vld [vmem:[#allocation7 + $0x80] sm:$0xf]
        %v609 = vld [vmem:[#allocation7 + $0x84] sm:$0xf]
        %v610 = vld [vmem:[#allocation7 + $0x88] sm:$0xf]
        %v611 = vld [vmem:[#allocation7 + $0x8c] sm:$0xf]
        %v612 = vld [vmem:[#allocation7 + $0x90] sm:$0xf]
        %v613 = vld [vmem:[#allocation7 + $0x94] sm:$0xf]
        %v614 = vld [vmem:[#allocation7 + $0x98] sm:$0xf]
        %v615 = vld [vmem:[#allocation7 + $0x9c] sm:$0xf]
        %v616 = vld [vmem:[#allocation7 + $0xa0] sm:$0xf]
        %v617 = vld [vmem:[#allocation7 + $0xa4] sm:$0xf]
        %v618 = vld [vmem:[#allocation7 + $0xa8] sm:$0xf]
        %v619 = vld [vmem:[#allocation7 + $0xac] sm:$0xf]
        %v620 = vld [vmem:[#allocation7 + $0xb0] sm:$0xf]
        %v621 = vld [vmem:[#allocation7 + $0xb4] sm:$0xf]
        %v622 = vld [vmem:[#allocation7 + $0xb8] sm:$0xf]
        %v623 = vld [vmem:[#allocation7 + $0xbc] sm:$0xf]
        %v624 = vld [vmem:[#allocation7 + $0xc0] sm:$0xf]
        %v625 = vld [vmem:[#allocation7 + $0xc4] sm:$0xf]
        %v626 = vld [vmem:[#allocation7 + $0xc8] sm:$0xf]
        %v627 = vld [vmem:[#allocation7 + $0xcc] sm:$0xf]
        %v628 = vld [vmem:[#allocation7 + $0xd0] sm:$0xf]
        %v629 = vld [vmem:[#allocation7 + $0xd4] sm:$0xf]
        %v630 = vld [vmem:[#allocation7 + $0xd8] sm:$0xf]
        %v631 = vld [vmem:[#allocation7 + $0xdc] sm:$0xf]
        %v632 = vld [vmem:[#allocation7 + $0xe0] sm:$0xf]
        %v633 = vld [vmem:[#allocation7 + $0xe4] sm:$0xf]
        %v634 = vld [vmem:[#allocation7 + $0xe8] sm:$0xf]
        %v635 = vld [vmem:[#allocation7 + $0xec] sm:$0xf]
        %v636 = vld [vmem:[#allocation7 + $0xf0] sm:$0xf]
        %v637 = vld [vmem:[#allocation7 + $0xf4] sm:$0xf]
        %v638 = vld [vmem:[#allocation7 + $0xf8] sm:$0xf]
        %v639 = vld [vmem:[#allocation7 + $0xfc] sm:$0xf]
        %v640 = vld [vmem:[%s4] sm:$0x1]
        %v642 = vlaneseq
        %v643 = vshrl.u32 %v642, 7
        %v644 = vsub.s32 0, %v643
        %v645 = vrot.slane %v640, %v644
        %v711 = vunpack.c.l.b16 %v576
        %v712 = vunpack.c.l.b16 %v577
        %v713 = vunpack.c.l.b16 %v578
        %v714 = vunpack.c.l.b16 %v579
        %v715 = vunpack.c.l.b16 %v580
        %v716 = vunpack.c.l.b16 %v581
        %v717 = vunpack.c.l.b16 %v582
        %v718 = vunpack.c.l.b16 %v583
        %v719 = vunpack.c.l.b16 %v584
        %v720 = vunpack.c.l.b16 %v585
        %v721 = vunpack.c.l.b16 %v586
        %v722 = vunpack.c.l.b16 %v587
        %v723 = vunpack.c.l.b16 %v588
        %v724 = vunpack.c.l.b16 %v589
        %v725 = vunpack.c.l.b16 %v590
        %v726 = vunpack.c.l.b16 %v591
        %v727 = vunpack.c.l.b16 %v592
        %v728 = vunpack.c.l.b16 %v593
        %v729 = vunpack.c.l.b16 %v594
        %v730 = vunpack.c.l.b16 %v595
        %v731 = vunpack.c.l.b16 %v596
        %v732 = vunpack.c.l.b16 %v597
        %v733 = vunpack.c.l.b16 %v598
        %v734 = vunpack.c.l.b16 %v599
        %v735 = vunpack.c.l.b16 %v600
        %v736 = vunpack.c.l.b16 %v601
        %v737 = vunpack.c.l.b16 %v602
        %v738 = vunpack.c.l.b16 %v603
        %v739 = vunpack.c.l.b16 %v604
        %v740 = vunpack.c.l.b16 %v605
        %v741 = vunpack.c.l.b16 %v606
        %v742 = vunpack.c.l.b16 %v607
        %v743 = vunpack.c.l.b16 %v608
        %v744 = vunpack.c.l.b16 %v609
        %v745 = vunpack.c.l.b16 %v610
        %v746 = vunpack.c.l.b16 %v611
        %v747 = vunpack.c.l.b16 %v612
        %v748 = vunpack.c.l.b16 %v613
        %v749 = vunpack.c.l.b16 %v614
        %v750 = vunpack.c.l.b16 %v615
        %v751 = vunpack.c.l.b16 %v616
        %v752 = vunpack.c.l.b16 %v617
        %v753 = vunpack.c.l.b16 %v618
        %v754 = vunpack.c.l.b16 %v619
        %v755 = vunpack.c.l.b16 %v620
        %v756 = vunpack.c.l.b16 %v621
        %v757 = vunpack.c.l.b16 %v622
        %v758 = vunpack.c.l.b16 %v623
        %v759 = vunpack.c.l.b16 %v624
        %v760 = vunpack.c.l.b16 %v625
        %v761 = vunpack.c.l.b16 %v626
        %v762 = vunpack.c.l.b16 %v627
        %v763 = vunpack.c.l.b16 %v628
        %v764 = vunpack.c.l.b16 %v629
        %v765 = vunpack.c.l.b16 %v630
        %v766 = vunpack.c.l.b16 %v631
        %v767 = vunpack.c.l.b16 %v632
        %v768 = vunpack.c.l.b16 %v633
        %v769 = vunpack.c.l.b16 %v634
        %v770 = vunpack.c.l.b16 %v635
        %v771 = vunpack.c.l.b16 %v636
        %v772 = vunpack.c.l.b16 %v637
        %v773 = vunpack.c.l.b16 %v638
        %v774 = vunpack.c.l.b16 %v639
        %v775 = vpack.c.b16 %v712, %v711
        %v776 = vpack.c.b16 %v714, %v713
        %v777 = vpack.c.b16 %v716, %v715
        %v778 = vpack.c.b16 %v718, %v717
        %v779 = vpack.c.b16 %v720, %v719
        %v780 = vpack.c.b16 %v722, %v721
        %v781 = vpack.c.b16 %v724, %v723
        %v782 = vpack.c.b16 %v726, %v725
        %v783 = vpack.c.b16 %v728, %v727
        %v784 = vpack.c.b16 %v730, %v729
        %v785 = vpack.c.b16 %v732, %v731
        %v786 = vpack.c.b16 %v734, %v733
        %v787 = vpack.c.b16 %v736, %v735
        %v788 = vpack.c.b16 %v738, %v737
        %v789 = vpack.c.b16 %v740, %v739
        %v790 = vpack.c.b16 %v742, %v741
        %v791 = vpack.c.b16 %v744, %v743
        %v792 = vpack.c.b16 %v746, %v745
        %v793 = vpack.c.b16 %v748, %v747
        %v794 = vpack.c.b16 %v750, %v749
        %v795 = vpack.c.b16 %v752, %v751
        %v796 = vpack.c.b16 %v754, %v753
        %v797 = vpack.c.b16 %v756, %v755
        %v798 = vpack.c.b16 %v758, %v757
        %v799 = vpack.c.b16 %v760, %v759
        %v800 = vpack.c.b16 %v762, %v761
        %v801 = vpack.c.b16 %v764, %v763
        %v802 = vpack.c.b16 %v766, %v765
        %v803 = vpack.c.b16 %v768, %v767
        %v804 = vpack.c.b16 %v770, %v769
        %v805 = vpack.c.b16 %v772, %v771
        %v806 = vpack.c.b16 %v774, %v773
        %839 = vmatprep.subr.bf16.mxu0 0
        %840 = vmatpush1.bf16.msra.mxu0 %v782
        %841 = vmatprep.subr.bf16.mxu0 0
        %842 = vmatpush1.bf16.msra.mxu0 %v781
        %843 = vmatprep.subr.bf16.mxu0 0
        %844 = vmatpush1.bf16.msra.mxu0 %v780
        %845 = vmatprep.subr.bf16.mxu0 0
        %846 = vmatpush1.bf16.msra.mxu0 %v779
        %847 = vmatprep.subr.bf16.mxu0 0
        %848 = vmatpush1.bf16.msra.mxu0 %v778
        %849 = vmatprep.subr.bf16.mxu0 0
        %850 = vmatpush1.bf16.msra.mxu0 %v777
        %851 = vmatprep.subr.bf16.mxu0 0
        %852 = vmatpush1.bf16.msra.mxu0 %v776
        %853 = vmatprep.subr.bf16.mxu0 0
        %854 = vmatpush1.bf16.msra.mxu0 %v775
        %855 = vmatprep.subr.bf16.mxu0 0
        %856 = vmatpush2.bf16.msra.mxu0 %v790
        %857 = vmatprep.subr.bf16.mxu0 0
        %858 = vmatpush2.bf16.msra.mxu0 %v789
        %859 = vmatprep.subr.bf16.mxu0 0
        %860 = vmatpush2.bf16.msra.mxu0 %v788
        %861 = vmatprep.subr.bf16.mxu0 0
        %862 = vmatpush2.bf16.msra.mxu0 %v787
        %863 = vmatprep.subr.bf16.mxu0 0
        %864 = vmatpush2.bf16.msra.mxu0 %v786
        %865 = vmatprep.subr.bf16.mxu0 0
        %866 = vmatpush2.bf16.msra.mxu0 %v785
        %867 = vmatprep.subr.bf16.mxu0 0
        %868 = vmatpush2.bf16.msra.mxu0 %v784
        %869 = vmatprep.subr.bf16.mxu0 0
        %870 = vmatpush2.bf16.msra.mxu0 %v783
        %871 = vmatprep.mubr.bf16.mxu0 %v573
        %872 = vmatmul.mubr.bf16.gmra.mxu0 %v572
        %v873 = vpop.f32.mrf.mxu0
        %v874 = vadd.f32 %v645, %v873
        %v875 = vpop.f32.mrf.mxu0
        %v876 = vpop.f32.mrf.mxu0
        %v877 = vpop.f32.mrf.mxu0
        %878 = vdwg.mxu0
        %879 = vmatprep.subr.bf16.mxu0 0
        %880 = vmatpush1.bf16.msra.mxu0 %v798
        %881 = vmatprep.subr.bf16.mxu0 0
        %882 = vmatpush1.bf16.msra.mxu0 %v797
        %883 = vmatprep.subr.bf16.mxu0 0
        %884 = vmatpush1.bf16.msra.mxu0 %v796
        %885 = vmatprep.subr.bf16.mxu0 0
        %886 = vmatpush1.bf16.msra.mxu0 %v795
        %887 = vmatprep.subr.bf16.mxu0 0
        %888 = vmatpush1.bf16.msra.mxu0 %v794
        %889 = vmatprep.subr.bf16.mxu0 0
        %890 = vmatpush1.bf16.msra.mxu0 %v793
        %891 = vmatprep.subr.bf16.mxu0 0
        %892 = vmatpush1.bf16.msra.mxu0 %v792
        %893 = vmatprep.subr.bf16.mxu0 0
        %894 = vmatpush1.bf16.msra.mxu0 %v791
        %895 = vmatprep.subr.bf16.mxu0 0
        %896 = vmatpush2.bf16.msra.mxu0 %v806
        %897 = vmatprep.subr.bf16.mxu0 0
        %898 = vmatpush2.bf16.msra.mxu0 %v805
        %899 = vmatprep.subr.bf16.mxu0 0
        %900 = vmatpush2.bf16.msra.mxu0 %v804
        %901 = vmatprep.subr.bf16.mxu0 0
        %902 = vmatpush2.bf16.msra.mxu0 %v803
        %903 = vmatprep.subr.bf16.mxu0 0
        %904 = vmatpush2.bf16.msra.mxu0 %v802
        %905 = vmatprep.subr.bf16.mxu0 0
        %906 = vmatpush2.bf16.msra.mxu0 %v801
        %907 = vmatprep.subr.bf16.mxu0 0
        %908 = vmatpush2.bf16.msra.mxu0 %v800
        %909 = vmatprep.subr.bf16.mxu0 0
        %910 = vmatpush2.bf16.msra.mxu0 %v799
        %911 = vmatprep.mubr.bf16.mxu0 %v575
        %912 = vmatmul.mubr.bf16.gmra.mxu0 %v574
        %v913 = vpop.f32.mrf.mxu0
        %v914 = vadd.f32 %v874, %v913
        %v915 = vpop.f32.mrf.mxu0
        %v916 = vpop.f32.mrf.mxu0
        %v917 = vpop.f32.mrf.mxu0
        %918 = vdwg.mxu0
        %919 = vst [vmem:[%s268] sm:$0xff] %v914
        %s920 = sand.u32 %s141, 1
        %s921 = scalar_lea.sflag [#allocation4], %s920
        %s922 = sand.u32 %s141, 1
        %s923 = smul.addr %s922, 8
        %s924 = scalar_lea.vmem [#allocation8], %s923
        // Predicated region
        $region53: #{feedforward.1} parent=39 // pred_check
          %p925 = pneg %p151
        $region54: #{feedforward.1} parent=39 // pred_check_branch
          %927 = sbr.rel (%p925) target = $region56
        $region55: #{feedforward.1} parent=39 // pred_region
          %s929 = ssub.s32 128, 128
          %930 = vsyncadd %s921, %s929
          %s931 = smul.addr %s23, 128
          %s932 = scalar_lea.hbm %s5, %s931
          %s934 = sshll.u32 %s924, 4
          %s935 = int_to_ptr.vmem [resolvable:$true] %s934
          %937 = dma.vmem_to_hbm [thread:$0]  %s935, 128, %s932, %s921
        $region56: #{feedforward.1} parent=39 // pred_fallthru
          _
      $region40: #{feedforward.1} parent=5 // pred_fallthru
        _
      %p938 = scmp.le.s32.totalorder 2, %s18
      // Predicated region
      $region57: #{feedforward.1} parent=5 // pred_check
        %p939 = pneg %p938
      $region58: #{feedforward.1} parent=5 // pred_check_branch
        %941 = sbr.rel (%p939) target = $region60
      $region59: #{feedforward.1} parent=5 // pred_region
        %s942 = ssub.s32 %s18, 2
        // Predicated region
        $region61: #{feedforward.1} parent=59 // pred_check
          %p943 = pneg %p157
        $region62: #{feedforward.1} parent=59 // pred_check_branch
          %945 = sbr.rel (%p943) target = $region64
        $region63: #{feedforward.1} parent=59 // pred_region
          %s946 = sand.u32 %s142, 1
          %s947 = scalar_lea.sflag [#allocation4], %s946
          %s948 = sand.u32 %s142, 1
          %s949 = smul.addr %s948, 8
          %s950 = scalar_lea.vmem [#allocation8], %s949
          %951 = dma.done %s947, 128
        $region64: #{feedforward.1} parent=59 // pred_fallthru
          _
      $region60: #{feedforward.1} parent=5 // pred_fallthru
        _
    $region6: #{feedforward.1} parent=1 // loop_footer
      %s22 = sadd.s32 1, %s18
    $region7: #{feedforward.1} parent=1 // loop_footer_branch
      %17 = sbr.rel target = $region3
    $region8: #{feedforward.1} parent=1 // loop_exit
      _
    %952 = vsyncpa [#allocation3], 1
    %s953 = scalar_lea.sflag [#allocation3], 1
    %954 = vsyncpa %s953, 1
    %955 = vsyncpa [#allocation6], 1
    %956 = vsyncpa [#allocation4], 1
    %s957 = scalar_lea.sflag [#allocation4], 1
    %958 = vsyncpa %s957, 1

</llo_original>
